<compile_context>
chip_gen: v6e
topology: v6e:2x2x1
jax: 0.10.0
libtpu: 0.0.40
codegen_flags: <defaults>
</compile_context>

<pallas_src>
import jax
import jax.numpy as jnp
from jax import lax
from jax.experimental import pallas as pl
from jax.experimental.pallas import tpu as pltpu

LANE = 128               # TPU vreg lane width
SUBLANE = 8              # f32 sublane count
TARGET_BLOCK_ROWS = 2048  # 2048*128*4B = 1 MiB f32 per tile (2 MiB double-buffered)


def _cdiv(a, b):
    return -(-a // b)


def _round_up(a, b):
    return _cdiv(a, b) * b


def _make_gan_loss_kernel(loss_name, label, sign, inv_count, n_valid,
                          tile_elems, blocks_per_split, has_pad):
    """Builds the per-tile GAN-loss accumulation kernel.

    loss_name / label / sign / inv_count / n_valid / tile_elems /
    blocks_per_split / has_pad are Python constants baked into the trace
    (they come from the module's registered buffers / static shapes).
    """

    def kernel(x_ref, o_ref):
        j = pl.program_id(1)  # inner reduction axis

        @pl.when(j == 0)
        def _init():
            o_ref[...] = jnp.zeros_like(o_ref)

        x = x_ref[...].astype(jnp.float32)

        if loss_name == "vanilla":
            # Numerically stable BCEWithLogits with a constant target `label`:
            #   max(x, 0) - x*y + log(1 + exp(-|x|))
            per_elem = (jnp.maximum(x, 0.0) - x * label
                        + jnp.log1p(jnp.exp(-jnp.abs(x))))
        elif loss_name == "lsgan":
            d = x - label
            per_elem = d * d
        else:  # wgangp: +/- mean(prediction)
            per_elem = sign * x

        if has_pad:
            # Mask the tail padding in-kernel (no mask tensor streamed from HBM).
            i = pl.program_id(0)
            base = (i * blocks_per_split + j) * tile_elems
            rows, lanes = per_elem.shape
            row_ids = lax.broadcasted_iota(jnp.int32, (rows, lanes), 0)
            col_ids = lax.broadcasted_iota(jnp.int32, (rows, lanes), 1)
            flat_idx = base + row_ids * lanes + col_ids
            per_elem = jnp.where(flat_idx < n_valid, per_elem, 0.0)

        # Vector-shaped accumulation: fold the tile down to one (8, 128) vreg
        # worth of partial sums (pure VPU adds, hidden under DMA).
        o_ref[...] += per_elem.reshape(-1, SUBLANE, LANE).sum(axis=0)

        @pl.when(j == pl.num_programs(1) - 1)
        def _finalize():
            o_ref[...] = o_ref[...] * inv_count

    return kernel


class GANLoss:
    """JAX/Pallas port of model/networks.py::GANLoss forward."""

    def __init__(self, loss_name, real_label_conf=1.0, gene_label_conf=0.0):
        if loss_name not in ("vanilla", "lsgan", "wgangp"):
            raise NotImplementedError(
                f"GAN loss name {loss_name} is not implemented!!!!")
        self.loss_name = loss_name
        # registered buffers (scalars) -- deterministic, set in-script
        self.real_label = float(real_label_conf)
        self.gene_label = float(gene_label_conf)

    def __call__(self, prediction, label_is_real):
        # NOTE: label_is_real and loss_name are static Python values
        # (as in the PyTorch module, where they drive Python control flow).
        n = int(prediction.size)
        flat = prediction.reshape(-1)  # keep native dtype; cast in-kernel

        rows = _cdiv(n, LANE)
        block_rows = min(TARGET_BLOCK_ROWS, _round_up(rows, SUBLANE))
        num_blocks = _cdiv(rows, block_rows)

        # v7x megacore: split the reduction across both TensorCores when the
        # block count allows a clean 2-way split (no extra padding needed).
        num_splits = 2 if (num_blocks >= 2 and num_blocks % 2 == 0) else 1
        blocks_per_split = num_blocks // num_splits

        rows_padded = num_blocks * block_rows
        n_padded = rows_padded * LANE
        pad = n_padded - n
        if pad:  # only pads up to one tile; skipped entirely when aligned
            flat = jnp.pad(flat, (0, pad))
        x2d = flat.reshape(rows_padded, LANE)

        label = self.real_label if label_is_real else self.gene_label
        sign = -1.0 if (self.loss_name == "wgangp" and label_is_real) else 1.0
        kernel = _make_gan_loss_kernel(
            self.loss_name, label, sign, 1.0 / n, n,
            block_rows * LANE, blocks_per_split, pad > 0)

        partials = pl.pallas_call(
            kernel,
            out_shape=jax.ShapeDtypeStruct((num_splits * SUBLANE, LANE),
                                           jnp.float32),
            grid_spec=pltpu.PrefetchScalarGridSpec(
                num_scalar_prefetch=0,
                grid=(num_splits, blocks_per_split),
                in_specs=[pl.BlockSpec(
                    (block_rows, LANE),
                    lambda i, j: (i * blocks_per_split + j, 0))],
                out_specs=pl.BlockSpec((SUBLANE, LANE), lambda i, j: (i, 0)),
            ),
            compiler_params=pltpu.CompilerParams(
                dimension_semantics=("parallel", "arbitrary")),
        )(x2d)

        # Partials already carry the 1/n factor; one tiny reduction here.
        return jnp.sum(partials)


def _reference_loss(x, loss_name, label_is_real,
                    real_label=1.0, gene_label=0.0):
    label = real_label if label_is_real else gene_label
    x = x.astype(jnp.float32)
    if loss_name == "vanilla":
        return jnp.mean(jax.nn.softplus(x) - x * label)
    if loss_name == "lsgan":
        return jnp.mean((x - label) ** 2)
    return -jnp.mean(x) if label_is_real else jnp.mean(x)


if __name__ == "__main__":
    key = jax.random.PRNGKey(0)
    k1, k2 = jax.random.split(key)

    # Discriminator-style prediction maps, NCHW like the PyTorch module expects.
    cases = [
        jax.random.normal(k1, (2, 4, 16, 16), dtype=jnp.float32),   # tile-aligned
        jax.random.normal(k2, (2, 3, 7, 5), dtype=jnp.float32),     # ragged -> in-kernel mask
        jax.random.normal(k1, (2, 4, 16, 16)).astype(jnp.bfloat16), # native bf16 stream
    ]

    ok = True
    for prediction in cases:
        for loss_name in ("vanilla", "lsgan", "wgangp"):
            criterion = GANLoss(loss_name)
            for label_is_real in (True, False):
                loss = criterion(prediction, label_is_real)
                loss = jax.block_until_ready(loss)
                ref = _reference_loss(prediction, loss_name, label_is_real)
                ok = ok and bool(jnp.allclose(loss, ref, atol=1e-4, rtol=1e-4))

    if ok:
        print("KERNEL_OK")
    else:
        raise SystemExit("mismatch vs reference")
</pallas_src>

<mosaic_0001>
module attributes {stable_mosaic.version = 11 : i64} {
  func.func @kernel(%arg0: i32, %arg1: i32, %arg2: memref<16x128xf32, #tpu.memory_space<vmem>>, %arg3: memref<8x128xf32, #tpu.memory_space<vmem>>) attributes {dimension_semantics = [#tpu.dimension_semantics<parallel>, #tpu.dimension_semantics<arbitrary>], iteration_bounds = array<i64: 1, 1>, scalar_prefetch = 0 : i64, scratch_operands = 0 : i64, tpu.core_type = #tpu.core_type<tc>, window_params = [{transform_indices = @transform_0, window_bounds = array<i64: 16, 128>}, {transform_indices = @transform_1, window_bounds = array<i64: 8, 128>}]} {
    %c0_i32 = arith.constant 0 : i32
    %0 = arith.cmpi eq, %arg1, %c0_i32 : i32
    %1 = arith.extui %0 : i1 to i32
    %c0_i32_0 = arith.constant 0 : i32
    %2 = arith.cmpi ne, %1, %c0_i32_0 : i32
    scf.if %2 {
      %cst_11 = arith.constant 0.000000e+00 : f32
      %23 = vector.broadcast %cst_11 : f32 to vector<8x128xf32>
      %c0_12 = arith.constant 0 : index
      %c0_13 = arith.constant 0 : index
      %24 = vector.load %arg3[%c0_12, %c0_13] : memref<8x128xf32, #tpu.memory_space<vmem>>, vector<8x128xf32>
      tpu.vector_store %arg3[%c0_12, %c0_13], %23 {strides = array<i32>} : memref<8x128xf32, #tpu.memory_space<vmem>>, vector<8x128xf32>,
    } else {
    }
    %c0 = arith.constant 0 : index
    %c0_1 = arith.constant 0 : index
    %3 = vector.load %arg2[%c0, %c0_1] : memref<16x128xf32, #tpu.memory_space<vmem>>, vector<16x128xf32>
    %cst = arith.constant 0.000000e+00 : f32
    %4 = vector.broadcast %cst : f32 to vector<16x128xf32>
    %5 = arith.maximumf %3, %4 : vector<16x128xf32>
    %cst_2 = arith.constant 1.000000e+00 : f32
    %6 = vector.broadcast %cst_2 : f32 to vector<16x128xf32>
    %7 = arith.mulf %3, %6 : vector<16x128xf32>
    %8 = arith.subf %5, %7 : vector<16x128xf32>
    %9 = math.absf %3 : vector<16x128xf32>
    %cst_3 = arith.constant 0.000000e+00 : f32
    %10 = vector.broadcast %cst_3 : f32 to vector<16x128xf32>
    %11 = arith.subf %10, %9 : vector<16x128xf32>
    %12 = math.exp %11 : vector<16x128xf32>
    %13 = math.log1p %12 : vector<16x128xf32>
    %14 = arith.addf %8, %13 : vector<16x128xf32>
    %c0_4 = arith.constant 0 : index
    %c0_5 = arith.constant 0 : index
    %15 = vector.load %arg3[%c0_4, %c0_5] : memref<8x128xf32, #tpu.memory_space<vmem>>, vector<8x128xf32>
    %16 = vector.shape_cast %14 : vector<16x128xf32> to vector<2x8x128xf32>
    %cst_6 = arith.constant dense<0.000000e+00> : vector<8x128xf32>
    %17 = vector.multi_reduction <add>, %16, %cst_6 [0] : vector<2x8x128xf32> to vector<8x128xf32>
    %18 = arith.addf %15, %17 : vector<8x128xf32>
    %c0_7 = arith.constant 0 : index
    %c0_8 = arith.constant 0 : index
    %19 = vector.load %arg3[%c0_7, %c0_8] : memref<8x128xf32, #tpu.memory_space<vmem>>, vector<8x128xf32>
    tpu.vector_store %arg3[%c0_7, %c0_8], %18 {strides = array<i32>} : memref<8x128xf32, #tpu.memory_space<vmem>>, vector<8x128xf32>,
    %c0_i32_9 = arith.constant 0 : i32
    %20 = arith.cmpi eq, %arg1, %c0_i32_9 : i32
    %21 = arith.extui %20 : i1 to i32
    %c0_i32_10 = arith.constant 0 : i32
    %22 = arith.cmpi ne, %21, %c0_i32_10 : i32
    scf.if %22 {
      %c0_11 = arith.constant 0 : index
      %c0_12 = arith.constant 0 : index
      %23 = vector.load %arg3[%c0_11, %c0_12] : memref<8x128xf32, #tpu.memory_space<vmem>>, vector<8x128xf32>
      %cst_13 = arith.constant 4.8828125E-4 : f32
      %24 = vector.broadcast %cst_13 : f32 to vector<8x128xf32>
      %25 = arith.mulf %23, %24 : vector<8x128xf32>
      %c0_14 = arith.constant 0 : index
      %c0_15 = arith.constant 0 : index
      %26 = vector.load %arg3[%c0_14, %c0_15] : memref<8x128xf32, #tpu.memory_space<vmem>>, vector<8x128xf32>
      tpu.vector_store %arg3[%c0_14, %c0_15], %25 {strides = array<i32>} : memref<8x128xf32, #tpu.memory_space<vmem>>, vector<8x128xf32>,
    } else {
    }
    return
  }
  func.func @transform_0(%arg0: i32, %arg1: i32) -> (i32, i32) {
    %c1_i32 = arith.constant 1 : i32
    %0 = arith.muli %arg0, %c1_i32 : i32
    %1 = arith.addi %0, %arg1 : i32
    %c0_i32 = arith.constant 0 : i32
    %c0_i32_0 = arith.constant 0 : i32
    return %1, %c0_i32 : i32, i32
  }
  func.func @transform_1(%arg0: i32, %arg1: i32) -> (i32, i32) {
    %c0_i32 = arith.constant 0 : i32
    %c0_i32_0 = arith.constant 0 : i32
    return %arg0, %c0_i32 : i32, i32
  }
}

</mosaic_0001>

<llo_original>
// kernel: tpu_custom_call.1
$region0: #{tpu_custom_call.1}
  #allocation0 [shape = 'u32[]', space=smem, size = 0x4, offset = 0x4, fixed_abs, tag = 'smem constant byte address 0x4 - core index']
  #allocation1 [shape = 'u32[144,128]{1,0:T(1,128)}', space=vmem, size = 0x12000, scoped, tag = 'internal scratch']
  %s0 = inlined_call_operand.hbm [shape: f32[16,128], index: 0, kind: input, shape index: {}]
  %s1 = inlined_call_operand.hbm [shape: f32[8,128], index: 1, kind: output, shape index: {}]
  %s2 = sld [smem:[#allocation0]]
  $region26: #{tpu_custom_call.1} parent=0
    _
  %s4 = ssub.s32 1, %s2
  %s5 = scalar_select 0, %s4, %s2
  $region1: #{tpu_custom_call.1} parent=0
    #allocation2 [shape = 'u8[8192]{0}', space=vmem, size = 0x2000, scoped, tag = 'input window, operand 0, single buffered']
    #allocation3 [shape = 's32[1]{0}', space=sflag, size = 0x4, scoped, tag = 'scoped memory for tpu_custom_call.1']
    #allocation4 [shape = 's32[1]{0}', space=sflag, size = 0x4, scoped, tag = 'scoped memory for tpu_custom_call.1']
    #allocation5 [shape = 'u8[4096]{0}', space=vmem, size = 0x1000, scoped, tag = 'output window, operand 0, single buffered']
    %6 = vsyncpa [#allocation3], 0
    %7 = vsyncpa [#allocation4], 0
    // Predicated region
    $region2: #{tpu_custom_call.1} parent=1 // pred_check
      _
    $region3: #{tpu_custom_call.1} parent=1 // pred_check_branch
      %9 = sbr.rel (0) target = $region5
    $region4: #{tpu_custom_call.1} parent=1 // pred_region
      %s10 = sadd.s32 0, 0
      %s11 = smul.u32 2, %s10
      %s13 = ssub.s32 256, 256
      %14 = vsyncadd [#allocation3], %s13
      %s15 = smul.addr %s11, 128
      %s16 = scalar_lea.hbm %s0, %s15
      %s17 = sshll.u32 [#allocation2], 4
      %s18 = int_to_ptr.vmem [resolvable:$true] %s17
      %23 = dma.hbm_to_vmem [thread:$0]  %s16, 256, %s18, [#allocation3], 128, 128, 8
    $region5: #{tpu_custom_call.1} parent=1 // pred_fallthru
      _
    // Predicated region
    $region6: #{tpu_custom_call.1} parent=1 // pred_check
      _
    $region7: #{tpu_custom_call.1} parent=1 // pred_check_branch
      %25 = sbr.rel (0) target = $region9
    $region8: #{tpu_custom_call.1} parent=1 // pred_region
      %26 = dma.done [#allocation3], 256
    $region9: #{tpu_custom_call.1} parent=1 // pred_fallthru
      _
    %s27 = sadd.s32 0, 0
    %s28 = smul.u32 2, %s27
    %p29 = scmp.eq.s32.totalorder 0, 0
    // Predicated region
    $region10: #{tpu_custom_call.1} parent=1 // pred_check
      %p30 = pneg %p29
    $region11: #{tpu_custom_call.1} parent=1 // pred_check_branch
      %32 = sbr.rel (%p30) target = $region13
    $region12: #{tpu_custom_call.1} parent=1 // pred_region
      %33 = vst [vmem:[#allocation5] sm:$0xff] 0.0
    $region13: #{tpu_custom_call.1} parent=1 // pred_fallthru
      _
    %v34 = vld [vmem:[#allocation2] sm:$0xff]
    %v35 = vld [vmem:[#allocation2 + $0x8] sm:$0xff]
    %v36 = vmax.f32 %v34, 0.0
    %v37 = vmax.f32 %v35, 0.0
    %v38 = vsub.f32 %v36, %v34
    %v39 = vsub.f32 %v37, %v35
    %v40 = vand.u32 2147483647, %v34
    %v41 = vand.u32 2147483647, %v35
    %v42 = vsub.f32 0.0, %v40
    %v43 = vsub.f32 0.0, %v41
    %v44 = vmul.f32 %v42, 1.442695
    %v45 = vpow.pop %v44
    %v46 = vmul.f32 %v43, 1.442695
    %v47 = vpow.pop %v46
    %v48 = vadd.f32 %v45, 1.0
    %v49 = vlog2.pop %v48
    %v50 = vmul.f32 %v49, 0.6931472
    %v51 = vmul.f32 -0.5, %v45
    %v52 = vadd.f32 %v51, 1.0
    %v53 = vmul.f32 %v52, %v45
    %v54 = vand.u32 2147483647, %v45
    %vm55 = vcmp.lt.f32.partialorder %v54, 0.0004427343
    %v56 = vsel %vm55, %v53, %v50
    %v57 = vadd.f32 %v47, 1.0
    %v58 = vlog2.pop %v57
    %v59 = vmul.f32 %v58, 0.6931472
    %v60 = vmul.f32 -0.5, %v47
    %v61 = vadd.f32 %v60, 1.0
    %v62 = vmul.f32 %v61, %v47
    %v63 = vand.u32 2147483647, %v47
    %vm64 = vcmp.lt.f32.partialorder %v63, 0.0004427343
    %v65 = vsel %vm64, %v62, %v59
    %v66 = vadd.f32 %v38, %v56
    %v67 = vadd.f32 %v39, %v65
    %v68 = vld [vmem:[#allocation5] sm:$0xff]
    %v69 = vadd.f32 %v66, %v67
    %v70 = vadd.f32 %v68, %v69
    %71 = vst [vmem:[#allocation5] sm:$0xff] %v70
    // Predicated region
    $region14: #{tpu_custom_call.1} parent=1 // pred_check
      %p72 = pneg %p29
    $region15: #{tpu_custom_call.1} parent=1 // pred_check_branch
      %74 = sbr.rel (%p72) target = $region17
    $region16: #{tpu_custom_call.1} parent=1 // pred_region
      %v75 = vld [vmem:[#allocation5] sm:$0xff]
      %v76 = vmul.f32 %v75, 0.00048828125
      %77 = vst [vmem:[#allocation5] sm:$0xff] %v76
    $region17: #{tpu_custom_call.1} parent=1 // pred_fallthru
      _
    // Predicated region
    $region18: #{tpu_custom_call.1} parent=1 // pred_check
      _
    $region19: #{tpu_custom_call.1} parent=1 // pred_check_branch
      %79 = sbr.rel (0) target = $region21
    $region20: #{tpu_custom_call.1} parent=1 // pred_region
      %s81 = ssub.s32 128, 128
      %82 = vsyncadd [#allocation4], %s81
      %s84 = sshll.u32 [#allocation5], 4
      %s85 = int_to_ptr.vmem [resolvable:$true] %s84
      %87 = dma.vmem_to_hbm [thread:$0]  %s85, 128, %s1, [#allocation4]
    $region21: #{tpu_custom_call.1} parent=1 // pred_fallthru
      _
    // Predicated region
    $region22: #{tpu_custom_call.1} parent=1 // pred_check
      _
    $region23: #{tpu_custom_call.1} parent=1 // pred_check_branch
      %89 = sbr.rel (0) target = $region25
    $region24: #{tpu_custom_call.1} parent=1 // pred_region
      %90 = dma.done [#allocation4], 128
    $region25: #{tpu_custom_call.1} parent=1 // pred_fallthru
      _
    %91 = vsyncpa [#allocation3], 1
    %92 = vsyncpa [#allocation4], 1

</llo_original>
